<compile_context>
chip_gen: v5e
topology: v5e:2x2
jax: 0.10.0
libtpu: 0.0.40
codegen_flags: <defaults>
</compile_context>

<pallas_src>
import functools

import jax
import jax.numpy as jnp
import numpy as np
from jax.experimental import pallas as pl
from jax.experimental.pallas import tpu as pltpu

VMEM = pl.BlockSpec(memory_space=pltpu.MemorySpace.VMEM)
_EPS = 1e-5     # PyTorch BatchNorm2d default eps
LANE = 128      # TPU lane width; every operand/activation is padded to this


# ---------------------------------------------------------------------------
# The single fused Pallas kernel
# ---------------------------------------------------------------------------
def cnn_fused_kernel(x_ref, w_ref, b_ref, out_ref, *, n_conv, n_fc, lane):
    """Whole CNN forward in one kernel.

    x_ref   : [B, lane]            NCHW-flat input (slab dtype)
    w_ref   : [lane, n_conv*4*lane + (n_fc+1)*lane]
              packed weight slab:  [T1 | T2 | W1 | W2 | W_out], all K=lane,
              conv operators have BN/scale folded in, 4 pool offsets stacked
              on lanes, each pool block zero-padded to `lane` columns.
    b_ref   : [1, (n_conv + n_fc + 1)*lane]   packed f32 bias rows (zero-padded)
    out_ref : [B, lane] f32        valid result in column 0
    """
    w_dt = w_ref.dtype
    h = x_ref[...]                                   # [B, lane], slab dtype
    w_off = 0
    b_off = 0
    q = lane

    # Conv blocks: one stacked MXU matmul (N = 4*lane), 4-way maxpool as pure
    # whole-vreg VPU max over lane-aligned slices, then bias + ReLU in f32.
    for _ in range(n_conv):
        t = w_ref[:, w_off:w_off + 4 * q]            # [lane, 4*lane]
        brow = b_ref[:, b_off:b_off + q]             # [1, lane] f32
        w_off += 4 * q
        b_off += q
        y = jnp.dot(h, t, preferred_element_type=jnp.float32)   # [B, 4*lane]
        m = jnp.maximum(jnp.maximum(y[:, 0:q], y[:, q:2 * q]),
                        jnp.maximum(y[:, 2 * q:3 * q], y[:, 3 * q:4 * q]))
        h = jnp.maximum(m + brow, 0.0).astype(w_dt)              # [B, lane]

    # FC head: fc_layers x (Linear + ReLU), then the output Linear.
    for li in range(n_fc + 1):
        w = w_ref[:, w_off:w_off + q]                # [lane, lane]
        b = b_ref[:, b_off:b_off + q]                # [1, lane] f32
        w_off += q
        b_off += q
        y = jnp.dot(h, w, preferred_element_type=jnp.float32) + b
        h = jnp.maximum(y, 0.0).astype(w_dt) if li < n_fc else y

    out_ref[...] = h                                 # f32, valid in column 0


# ---------------------------------------------------------------------------
# One-time (init) folding + packing of all operands into two slabs
# ---------------------------------------------------------------------------
def _build_select(Hin, Win):
    """A[p_in_spatial, pool_off, q_out_spatial, kh, kw] in {0,1}.

    A[...]=1 iff padded-conv tap (kh,kw) at pooled output (io,jo) with pool
    offset (di,dj) reads unpadded input position p (zero padding => no entry).
    """
    Hout, Wout = Hin // 2, Win // 2
    A = np.zeros((Hin * Win, 4, Hout * Wout, 3, 3), np.float32)
    for di in range(2):
        for dj in range(2):
            off = di * 2 + dj
            for io in range(Hout):
                for jo in range(Wout):
                    qix = io * Wout + jo
                    for kh in range(3):
                        for kw in range(3):
                            ri = 2 * io + di + kh - 1
                            si = 2 * jo + dj + kw - 1
                            if 0 <= ri < Hin and 0 <= si < Win:
                                A[ri * Win + si, off, qix, kh, kw] = 1.0
    return A


def prepare_operands(params, in_hw=8, lane=LANE, weight_dtype=jnp.bfloat16):
    """Fold BN/bias/layout, lane-pad everything, pack into 2 slabs. Done once."""
    w_cols, b_cols = [], []
    Hin = in_hw

    for (w, b, gamma, beta, rmean, rvar) in params["conv"]:
        Cout, Cin = w.shape[0], w.shape[1]
        Hout = Hin // 2
        scale = gamma / jnp.sqrt(rvar + _EPS)
        shift = beta - rmean * scale
        w_f = w * scale[:, None, None, None]               # [Cout, Cin, 3, 3]
        b_f = b * scale + shift                             # [Cout]
        K = Cin * Hin * Hin
        q_valid = Cout * Hout * Hout
        assert K <= lane and q_valid <= lane
        A = jnp.asarray(_build_select(Hin, Hin))            # [Hin*Win,4,Qsp,3,3]
        # T[c*Hin*Win + p, off, o*Qsp + q]  (NCHW-flat in and out)
        T = jnp.einsum("pfqhw,ochw->cpfoq", A, w_f).reshape(K, 4, q_valid)
        T = jnp.pad(T, ((0, lane - K), (0, 0), (0, lane - q_valid)))
        w_cols.append(T.reshape(lane, 4 * lane))
        brow = jnp.repeat(b_f, Hout * Hout)                 # NCHW-flat order
        b_cols.append(jnp.pad(brow, (0, lane - q_valid)).reshape(1, lane))
        Hin = Hout

    for (w, b) in list(params["fc"]) + [params["output"]]:
        fout, fin = w.shape
        assert fin <= lane and fout <= lane
        w_cols.append(jnp.pad(w.T, ((0, lane - fin), (0, lane - fout))))
        b_cols.append(jnp.pad(b, (0, lane - fout)).reshape(1, lane))

    w_slab = jnp.concatenate(w_cols, axis=1).astype(weight_dtype)
    b_slab = jnp.concatenate(b_cols, axis=1).astype(jnp.float32)
    return w_slab, b_slab


# ---------------------------------------------------------------------------
# Forward wrapper
# ---------------------------------------------------------------------------
def cnn_forward(w_slab, b_slab, x_nchw, n_conv=2, n_fc=2, lane=LANE):
    B = x_nchw.shape[0]
    x_flat = x_nchw.reshape(B, -1).astype(w_slab.dtype)     # NCHW-flat, free
    assert x_flat.shape[1] == lane, "input C*H*W must equal the lane width"
    out_pad = pl.pallas_call(
        functools.partial(cnn_fused_kernel, n_conv=n_conv, n_fc=n_fc, lane=lane),
        out_shape=jax.ShapeDtypeStruct((B, lane), jnp.float32),
        in_specs=[VMEM, VMEM, VMEM],
        out_specs=VMEM,
    )(x_flat, w_slab, b_slab)
    return out_pad[:, :1]                                    # valid column only


# ---------------------------------------------------------------------------
# Parameter init (PyTorch layouts) and pure-JAX reference
# ---------------------------------------------------------------------------
def init_params(key, conv_layers=2, fc_layers=2):
    params = {"conv": [], "fc": []}
    in_ch, out_ch = 2, 8
    for _ in range(conv_layers):
        key, k1, k2, k3, k4, k5, k6 = jax.random.split(key, 7)
        w = jax.random.normal(k1, (out_ch, in_ch, 3, 3), jnp.float32) * 0.1
        b = jax.random.normal(k2, (out_ch,), jnp.float32) * 0.1
        gamma = 1.0 + 0.1 * jax.random.normal(k3, (out_ch,), jnp.float32)
        beta = 0.1 * jax.random.normal(k4, (out_ch,), jnp.float32)
        rmean = 0.1 * jax.random.normal(k5, (out_ch,), jnp.float32)
        rvar = 1.0 + 0.1 * jnp.abs(jax.random.normal(k6, (out_ch,), jnp.float32))
        params["conv"].append((w, b, gamma, beta, rmean, rvar))
        in_ch, out_ch = out_ch, out_ch * 2

    dim = int(8 / 2 ** conv_layers)
    fc_input = in_ch * dim * dim
    fin, fout = fc_input, fc_input // 2
    for _ in range(fc_layers):
        key, k1, k2 = jax.random.split(key, 3)
        w = jax.random.normal(k1, (fout, fin), jnp.float32) / jnp.sqrt(float(fin))
        b = jax.random.normal(k2, (fout,), jnp.float32) * 0.1
        params["fc"].append((w, b))
        fin, fout = fout, fout // 2

    key, k1, k2 = jax.random.split(key, 3)
    params["output"] = (
        jax.random.normal(k1, (1, fin), jnp.float32) / jnp.sqrt(float(fin)),
        jax.random.normal(k2, (1,), jnp.float32) * 0.1,
    )
    return params


def reference_forward(params, x_nchw):
    """Pure-JAX mirror of the PyTorch module (BatchNorm in eval mode)."""
    out = x_nchw.astype(jnp.float32)
    for (w, b, gamma, beta, rmean, rvar) in params["conv"]:
        z = jax.lax.conv_general_dilated(
            out, w, window_strides=(1, 1), padding=((1, 1), (1, 1)),
            dimension_numbers=("NCHW", "OIHW", "NCHW"))
        z = z + b[None, :, None, None]
        scale = gamma / jnp.sqrt(rvar + _EPS)
        shift = beta - rmean * scale
        z = z * scale[None, :, None, None] + shift[None, :, None, None]
        z = jnp.maximum(z, 0.0)
        out = jax.lax.reduce_window(z, -jnp.inf, jax.lax.max,
                                    (1, 1, 2, 2), (1, 1, 2, 2), "VALID")
    out = out.reshape(out.shape[0], -1)              # x.view(-1, fc_input)
    for (w, b) in params["fc"]:
        out = jnp.maximum(out @ w.T + b, 0.0)
    w, b = params["output"]
    return out @ w.T + b


# ---------------------------------------------------------------------------
if __name__ == "__main__":
    key = jax.random.PRNGKey(0)
    kp, kx = jax.random.split(key)
    params = init_params(kp, conv_layers=2, fc_layers=2)

    # batch=2, in_channels=2, spatial 8x8 (NCHW, as the PyTorch module receives)
    x = jax.random.normal(kx, (2, 2, 8, 8), jnp.float32)
    ref = jax.block_until_ready(reference_forward(params, x))

    fwd = jax.jit(cnn_forward)

    # f32 weight slab: tight tolerance so bf16 quantization can't mask bugs.
    w32, b32 = prepare_operands(params, weight_dtype=jnp.float32)
    out32 = jax.block_until_ready(fwd(w32, b32, x))
    assert out32.shape == (2, 1) and out32.dtype == jnp.float32
    assert jnp.allclose(out32, ref, rtol=1e-3, atol=1e-3), (out32, ref)

    # bf16 weight slab: the production path (half the weight DMA bytes).
    wbf, bbf = prepare_operands(params, weight_dtype=jnp.bfloat16)
    outbf = jax.block_until_ready(fwd(wbf, bbf, x))
    assert outbf.shape == (2, 1)
    assert jnp.allclose(outbf, ref, rtol=2e-2, atol=2e-2), (outbf, ref)

    print("KERNEL_OK")
</pallas_src>

<mosaic_0001>
module attributes {stable_mosaic.version = 11 : i64} {
  func.func @cnn_fused_kernel(%arg0: memref<2x128xf32, #tpu.memory_space<vmem>>, %arg1: memref<128x1408xf32, #tpu.memory_space<vmem>>, %arg2: memref<1x640xf32, #tpu.memory_space<vmem>>, %arg3: memref<2x128xf32, #tpu.memory_space<vmem>>) attributes {dimension_semantics = [], scalar_prefetch = 0 : i64, scratch_operands = 0 : i64, tpu.core_type = #tpu.core_type<tc>} {
    %c0 = arith.constant 0 : index
    %c0_0 = arith.constant 0 : index
    %0 = vector.load %arg0[%c0, %c0_0] : memref<2x128xf32, #tpu.memory_space<vmem>>, vector<2x128xf32>
    %c0_1 = arith.constant 0 : index
    %c0_2 = arith.constant 0 : index
    %1 = vector.load %arg1[%c0_1, %c0_2] : memref<128x1408xf32, #tpu.memory_space<vmem>>, vector<128x512xf32>
    %c0_3 = arith.constant 0 : index
    %c0_4 = arith.constant 0 : index
    %2 = vector.load %arg2[%c0_3, %c0_4] : memref<1x640xf32, #tpu.memory_space<vmem>>, vector<1x128xf32>
    %cst = arith.constant dense<0.000000e+00> : vector<2x512xf32>
    %3 = tpu.matmul %0, %1, %cst {dimension_numbers = #tpu.dot_dimension_numbers<[1], [0], [0], [1], [0, 0, 1, 1], [], []>} : vector<2x128xf32>, vector<128x512xf32>, vector<2x512xf32> -> vector<2x512xf32>
    %4 = vector.extract_strided_slice %3 {offsets = [0, 0], sizes = [2, 128], strides = [1, 1]} : vector<2x512xf32> to vector<2x128xf32>
    %5 = vector.extract_strided_slice %3 {offsets = [0, 128], sizes = [2, 128], strides = [1, 1]} : vector<2x512xf32> to vector<2x128xf32>
    %6 = arith.maximumf %4, %5 : vector<2x128xf32>
    %7 = vector.extract_strided_slice %3 {offsets = [0, 256], sizes = [2, 128], strides = [1, 1]} : vector<2x512xf32> to vector<2x128xf32>
    %8 = vector.extract_strided_slice %3 {offsets = [0, 384], sizes = [2, 128], strides = [1, 1]} : vector<2x512xf32> to vector<2x128xf32>
    %9 = arith.maximumf %7, %8 : vector<2x128xf32>
    %10 = arith.maximumf %6, %9 : vector<2x128xf32>
    %11 = vector.broadcast %2 : vector<1x128xf32> to vector<2x128xf32>
    %12 = arith.addf %10, %11 : vector<2x128xf32>
    %cst_5 = arith.constant 0.000000e+00 : f32
    %13 = vector.broadcast %cst_5 : f32 to vector<2x128xf32>
    %14 = arith.maximumf %12, %13 : vector<2x128xf32>
    %c0_6 = arith.constant 0 : index
    %c512 = arith.constant 512 : index
    %15 = vector.load %arg1[%c0_6, %c512] : memref<128x1408xf32, #tpu.memory_space<vmem>>, vector<128x512xf32>
    %c0_7 = arith.constant 0 : index
    %c128 = arith.constant 128 : index
    %16 = vector.load %arg2[%c0_7, %c128] : memref<1x640xf32, #tpu.memory_space<vmem>>, vector<1x128xf32>
    %cst_8 = arith.constant dense<0.000000e+00> : vector<2x512xf32>
    %17 = tpu.matmul %14, %15, %cst_8 {dimension_numbers = #tpu.dot_dimension_numbers<[1], [0], [0], [1], [0, 0, 1, 1], [], []>} : vector<2x128xf32>, vector<128x512xf32>, vector<2x512xf32> -> vector<2x512xf32>
    %18 = vector.extract_strided_slice %17 {offsets = [0, 0], sizes = [2, 128], strides = [1, 1]} : vector<2x512xf32> to vector<2x128xf32>
    %19 = vector.extract_strided_slice %17 {offsets = [0, 128], sizes = [2, 128], strides = [1, 1]} : vector<2x512xf32> to vector<2x128xf32>
    %20 = arith.maximumf %18, %19 : vector<2x128xf32>
    %21 = vector.extract_strided_slice %17 {offsets = [0, 256], sizes = [2, 128], strides = [1, 1]} : vector<2x512xf32> to vector<2x128xf32>
    %22 = vector.extract_strided_slice %17 {offsets = [0, 384], sizes = [2, 128], strides = [1, 1]} : vector<2x512xf32> to vector<2x128xf32>
    %23 = arith.maximumf %21, %22 : vector<2x128xf32>
    %24 = arith.maximumf %20, %23 : vector<2x128xf32>
    %25 = vector.broadcast %16 : vector<1x128xf32> to vector<2x128xf32>
    %26 = arith.addf %24, %25 : vector<2x128xf32>
    %cst_9 = arith.constant 0.000000e+00 : f32
    %27 = vector.broadcast %cst_9 : f32 to vector<2x128xf32>
    %28 = arith.maximumf %26, %27 : vector<2x128xf32>
    %c0_10 = arith.constant 0 : index
    %c1024 = arith.constant 1024 : index
    %29 = vector.load %arg1[%c0_10, %c1024] : memref<128x1408xf32, #tpu.memory_space<vmem>>, vector<128x128xf32>
    %c0_11 = arith.constant 0 : index
    %c256 = arith.constant 256 : index
    %30 = vector.load %arg2[%c0_11, %c256] : memref<1x640xf32, #tpu.memory_space<vmem>>, vector<1x128xf32>
    %cst_12 = arith.constant dense<0.000000e+00> : vector<2x128xf32>
    %31 = tpu.matmul %28, %29, %cst_12 {dimension_numbers = #tpu.dot_dimension_numbers<[1], [0], [0], [1], [0, 0, 1, 1], [], []>} : vector<2x128xf32>, vector<128x128xf32>, vector<2x128xf32> -> vector<2x128xf32>
    %32 = vector.broadcast %30 : vector<1x128xf32> to vector<2x128xf32>
    %33 = arith.addf %31, %32 : vector<2x128xf32>
    %cst_13 = arith.constant 0.000000e+00 : f32
    %34 = vector.broadcast %cst_13 : f32 to vector<2x128xf32>
    %35 = arith.maximumf %33, %34 : vector<2x128xf32>
    %c0_14 = arith.constant 0 : index
    %c1152 = arith.constant 1152 : index
    %36 = vector.load %arg1[%c0_14, %c1152] : memref<128x1408xf32, #tpu.memory_space<vmem>>, vector<128x128xf32>
    %c0_15 = arith.constant 0 : index
    %c384 = arith.constant 384 : index
    %37 = vector.load %arg2[%c0_15, %c384] : memref<1x640xf32, #tpu.memory_space<vmem>>, vector<1x128xf32>
    %cst_16 = arith.constant dense<0.000000e+00> : vector<2x128xf32>
    %38 = tpu.matmul %35, %36, %cst_16 {dimension_numbers = #tpu.dot_dimension_numbers<[1], [0], [0], [1], [0, 0, 1, 1], [], []>} : vector<2x128xf32>, vector<128x128xf32>, vector<2x128xf32> -> vector<2x128xf32>
    %39 = vector.broadcast %37 : vector<1x128xf32> to vector<2x128xf32>
    %40 = arith.addf %38, %39 : vector<2x128xf32>
    %cst_17 = arith.constant 0.000000e+00 : f32
    %41 = vector.broadcast %cst_17 : f32 to vector<2x128xf32>
    %42 = arith.maximumf %40, %41 : vector<2x128xf32>
    %c0_18 = arith.constant 0 : index
    %c1280 = arith.constant 1280 : index
    %43 = vector.load %arg1[%c0_18, %c1280] : memref<128x1408xf32, #tpu.memory_space<vmem>>, vector<128x128xf32>
    %c0_19 = arith.constant 0 : index
    %c512_20 = arith.constant 512 : index
    %44 = vector.load %arg2[%c0_19, %c512_20] : memref<1x640xf32, #tpu.memory_space<vmem>>, vector<1x128xf32>
    %cst_21 = arith.constant dense<0.000000e+00> : vector<2x128xf32>
    %45 = tpu.matmul %42, %43, %cst_21 {dimension_numbers = #tpu.dot_dimension_numbers<[1], [0], [0], [1], [0, 0, 1, 1], [], []>} : vector<2x128xf32>, vector<128x128xf32>, vector<2x128xf32> -> vector<2x128xf32>
    %46 = vector.broadcast %44 : vector<1x128xf32> to vector<2x128xf32>
    %47 = arith.addf %45, %46 : vector<2x128xf32>
    %c0_22 = arith.constant 0 : index
    %c0_23 = arith.constant 0 : index
    %48 = vector.load %arg3[%c0_22, %c0_23] : memref<2x128xf32, #tpu.memory_space<vmem>>, vector<2x128xf32>
    tpu.vector_store %arg3[%c0_22, %c0_23], %47 {strides = array<i32>} : memref<2x128xf32, #tpu.memory_space<vmem>>, vector<2x128xf32>,
    return
  }
}

</mosaic_0001>

<llo_original>
// kernel: cnn_forward.1
$region0: #{cnn_forward.1}
  #allocation0 [shape = 'u32[]', space=smem, size = 0x4, offset = 0x4, fixed_abs, tag = 'smem constant byte address 0x4 - core index']
  #allocation1 [shape = 'u32[72,128]{1,0:T(1,128)}', space=vmem, size = 0x9000, scoped, tag = 'internal scratch']
  %s0 = inlined_call_operand.vmem [shape: f32[2,128], index: 0, kind: input, shape index: {}]
  %s1 = inlined_call_operand.hbm [shape: f32[128,1408], index: 1, kind: input, shape index: {}]
  %s2 = inlined_call_operand.vmem [shape: f32[1,640], index: 2, kind: input, shape index: {}]
  %s3 = inlined_call_operand.vmem [shape: f32[2,128], index: 3, kind: output, shape index: {}]
  %s4 = sld [smem:[#allocation0]]
  $region26: #{cnn_forward.1} parent=0
    _
  %s6 = ssub.s32 1, %s4
  %s7 = scalar_select 0, %s6, %s4
  $region1: #{cnn_forward.1} parent=0
    #allocation2 [shape = 'u8[720896]{0}', space=vmem, size = 0xb0000, scoped, tag = 'input window, operand 1, single buffered']
    #allocation3 [shape = 's32[1]{0}', space=sflag, size = 0x4, scoped, tag = 'scoped memory for cnn_forward.1']
    %8 = vsyncpa [#allocation3], 0
    // Predicated region
    $region2: #{cnn_forward.1} parent=1 // pred_check
      _
    $region3: #{cnn_forward.1} parent=1 // pred_check_branch
      %10 = sbr.rel (0) target = $region5
    $region4: #{cnn_forward.1} parent=1 // pred_region
      _
    $region5: #{cnn_forward.1} parent=1 // pred_fallthru
      _
    // Predicated region
    $region6: #{cnn_forward.1} parent=1 // pred_check
      _
    $region7: #{cnn_forward.1} parent=1 // pred_check_branch
      %12 = sbr.rel (0) target = $region9
    $region8: #{cnn_forward.1} parent=1 // pred_region
      %14 = vsyncadd [#allocation3], 0
      %s15 = sshll.u32 %s1, 4
      %s16 = int_to_ptr.hbm [resolvable:$true] %s15
      %s17 = sshll.u32 [#allocation2], 4
      %s18 = int_to_ptr.vmem [resolvable:$true] %s17
      %23 = dma.hbm_to_vmem [thread:$0]  %s16, 22528, %s18, [#allocation3], 1408, 1408, 88
    $region9: #{cnn_forward.1} parent=1 // pred_fallthru
      _
    // Predicated region
    $region10: #{cnn_forward.1} parent=1 // pred_check
      _
    $region11: #{cnn_forward.1} parent=1 // pred_check_branch
      %25 = sbr.rel (0) target = $region13
    $region12: #{cnn_forward.1} parent=1 // pred_region
      _
    $region13: #{cnn_forward.1} parent=1 // pred_fallthru
      _
    // Predicated region
    $region14: #{cnn_forward.1} parent=1 // pred_check
      _
    $region15: #{cnn_forward.1} parent=1 // pred_check_branch
      %27 = sbr.rel (0) target = $region17
    $region16: #{cnn_forward.1} parent=1 // pred_region
      %29 = dma.done [#allocation3], 22528
    $region17: #{cnn_forward.1} parent=1 // pred_fallthru
      _
    %v30 = vld [vmem:[%s0] sm:$0x3]
    %v31 = vld [vmem:[#allocation2] sm:$0xff]
    %v32 = vld [vmem:[#allocation2 + $0x8] sm:$0xff]
    %v33 = vld [vmem:[#allocation2 + $0x10] sm:$0xff]
    %v34 = vld [vmem:[#allocation2 + $0x18] sm:$0xff]
    %v35 = vld [vmem:[#allocation2 + $0x58] sm:$0xff]
    %v36 = vld [vmem:[#allocation2 + $0x60] sm:$0xff]
    %v37 = vld [vmem:[#allocation2 + $0x68] sm:$0xff]
    %v38 = vld [vmem:[#allocation2 + $0x70] sm:$0xff]
    %v39 = vld [vmem:[#allocation2 + $0xb0] sm:$0xff]
    %v40 = vld [vmem:[#allocation2 + $0xb8] sm:$0xff]
    %v41 = vld [vmem:[#allocation2 + $0xc0] sm:$0xff]
    %v42 = vld [vmem:[#allocation2 + $0xc8] sm:$0xff]
    %v43 = vld [vmem:[#allocation2 + $0x108] sm:$0xff]
    %v44 = vld [vmem:[#allocation2 + $0x110] sm:$0xff]
    %v45 = vld [vmem:[#allocation2 + $0x118] sm:$0xff]
    %v46 = vld [vmem:[#allocation2 + $0x120] sm:$0xff]
    %v47 = vld [vmem:[#allocation2 + $0x160] sm:$0xff]
    %v48 = vld [vmem:[#allocation2 + $0x168] sm:$0xff]
    %v49 = vld [vmem:[#allocation2 + $0x170] sm:$0xff]
    %v50 = vld [vmem:[#allocation2 + $0x178] sm:$0xff]
    %v51 = vld [vmem:[#allocation2 + $0x1b8] sm:$0xff]
    %v52 = vld [vmem:[#allocation2 + $0x1c0] sm:$0xff]
    %v53 = vld [vmem:[#allocation2 + $0x1c8] sm:$0xff]
    %v54 = vld [vmem:[#allocation2 + $0x1d0] sm:$0xff]
    %v55 = vld [vmem:[#allocation2 + $0x210] sm:$0xff]
    %v56 = vld [vmem:[#allocation2 + $0x218] sm:$0xff]
    %v57 = vld [vmem:[#allocation2 + $0x220] sm:$0xff]
    %v58 = vld [vmem:[#allocation2 + $0x228] sm:$0xff]
    %v59 = vld [vmem:[#allocation2 + $0x268] sm:$0xff]
    %v60 = vld [vmem:[#allocation2 + $0x270] sm:$0xff]
    %v61 = vld [vmem:[#allocation2 + $0x278] sm:$0xff]
    %v62 = vld [vmem:[#allocation2 + $0x280] sm:$0xff]
    %v63 = vld [vmem:[#allocation2 + $0x2c0] sm:$0xff]
    %v64 = vld [vmem:[#allocation2 + $0x2c8] sm:$0xff]
    %v65 = vld [vmem:[#allocation2 + $0x2d0] sm:$0xff]
    %v66 = vld [vmem:[#allocation2 + $0x2d8] sm:$0xff]
    %v67 = vld [vmem:[#allocation2 + $0x318] sm:$0xff]
    %v68 = vld [vmem:[#allocation2 + $0x320] sm:$0xff]
    %v69 = vld [vmem:[#allocation2 + $0x328] sm:$0xff]
    %v70 = vld [vmem:[#allocation2 + $0x330] sm:$0xff]
    %v71 = vld [vmem:[#allocation2 + $0x370] sm:$0xff]
    %v72 = vld [vmem:[#allocation2 + $0x378] sm:$0xff]
    %v73 = vld [vmem:[#allocation2 + $0x380] sm:$0xff]
    %v74 = vld [vmem:[#allocation2 + $0x388] sm:$0xff]
    %v75 = vld [vmem:[#allocation2 + $0x3c8] sm:$0xff]
    %v76 = vld [vmem:[#allocation2 + $0x3d0] sm:$0xff]
    %v77 = vld [vmem:[#allocation2 + $0x3d8] sm:$0xff]
    %v78 = vld [vmem:[#allocation2 + $0x3e0] sm:$0xff]
    %v79 = vld [vmem:[#allocation2 + $0x420] sm:$0xff]
    %v80 = vld [vmem:[#allocation2 + $0x428] sm:$0xff]
    %v81 = vld [vmem:[#allocation2 + $0x430] sm:$0xff]
    %v82 = vld [vmem:[#allocation2 + $0x438] sm:$0xff]
    %v83 = vld [vmem:[#allocation2 + $0x478] sm:$0xff]
    %v84 = vld [vmem:[#allocation2 + $0x480] sm:$0xff]
    %v85 = vld [vmem:[#allocation2 + $0x488] sm:$0xff]
    %v86 = vld [vmem:[#allocation2 + $0x490] sm:$0xff]
    %v87 = vld [vmem:[#allocation2 + $0x4d0] sm:$0xff]
    %v88 = vld [vmem:[#allocation2 + $0x4d8] sm:$0xff]
    %v89 = vld [vmem:[#allocation2 + $0x4e0] sm:$0xff]
    %v90 = vld [vmem:[#allocation2 + $0x4e8] sm:$0xff]
    %v91 = vld [vmem:[#allocation2 + $0x528] sm:$0xff]
    %v92 = vld [vmem:[#allocation2 + $0x530] sm:$0xff]
    %v93 = vld [vmem:[#allocation2 + $0x538] sm:$0xff]
    %v94 = vld [vmem:[#allocation2 + $0x540] sm:$0xff]
    %v95 = vld [vmem:[%s2] sm:$0x1]
    %96 = vmatpush.msra.mxu0 %v91
    %97 = vmatpush.msra.mxu0 %v87
    %98 = vmatpush.msra.mxu0 %v83
    %99 = vmatpush.msra.mxu0 %v79
    %100 = vmatpush.msra.mxu0 %v75
    %101 = vmatpush.msra.mxu0 %v71
    %102 = vmatpush.msra.mxu0 %v67
    %103 = vmatpush.msra.mxu0 %v63
    %104 = vmatpush.msra.mxu0 %v59
    %105 = vmatpush.msra.mxu0 %v55
    %106 = vmatpush.msra.mxu0 %v51
    %107 = vmatpush.msra.mxu0 %v47
    %108 = vmatpush.msra.mxu0 %v43
    %109 = vmatpush.msra.mxu0 %v39
    %110 = vmatpush.msra.mxu0 %v35
    %111 = vmatpush.msra.mxu0 %v31
    %112 = vmatmul.f32.gmra.mxu0 %v30
    %v113 = vpop.f32.mrf.mxu0
    %v114 = vadd.f32 0.0, %v113
    %115 = vdwg.mxu0
    %116 = vmatpush.msra.mxu0 %v92
    %117 = vmatpush.msra.mxu0 %v88
    %118 = vmatpush.msra.mxu0 %v84
    %119 = vmatpush.msra.mxu0 %v80
    %120 = vmatpush.msra.mxu0 %v76
    %121 = vmatpush.msra.mxu0 %v72
    %122 = vmatpush.msra.mxu0 %v68
    %123 = vmatpush.msra.mxu0 %v64
    %124 = vmatpush.msra.mxu0 %v60
    %125 = vmatpush.msra.mxu0 %v56
    %126 = vmatpush.msra.mxu0 %v52
    %127 = vmatpush.msra.mxu0 %v48
    %128 = vmatpush.msra.mxu0 %v44
    %129 = vmatpush.msra.mxu0 %v40
    %130 = vmatpush.msra.mxu0 %v36
    %131 = vmatpush.msra.mxu0 %v32
    %132 = vmatmul.f32.gmra.mxu0 %v30
    %v133 = vpop.f32.mrf.mxu0
    %v134 = vadd.f32 0.0, %v133
    %135 = vdwg.mxu0
    %136 = vmatpush.msra.mxu0 %v93
    %137 = vmatpush.msra.mxu0 %v89
    %138 = vmatpush.msra.mxu0 %v85
    %139 = vmatpush.msra.mxu0 %v81
    %140 = vmatpush.msra.mxu0 %v77
    %141 = vmatpush.msra.mxu0 %v73
    %142 = vmatpush.msra.mxu0 %v69
    %143 = vmatpush.msra.mxu0 %v65
    %144 = vmatpush.msra.mxu0 %v61
    %145 = vmatpush.msra.mxu0 %v57
    %146 = vmatpush.msra.mxu0 %v53
    %147 = vmatpush.msra.mxu0 %v49
    %148 = vmatpush.msra.mxu0 %v45
    %149 = vmatpush.msra.mxu0 %v41
    %150 = vmatpush.msra.mxu0 %v37
    %151 = vmatpush.msra.mxu0 %v33
    %152 = vmatmul.f32.gmra.mxu0 %v30
    %v153 = vpop.f32.mrf.mxu0
    %v154 = vadd.f32 0.0, %v153
    %155 = vdwg.mxu0
    %156 = vmatpush.msra.mxu0 %v94
    %157 = vmatpush.msra.mxu0 %v90
    %158 = vmatpush.msra.mxu0 %v86
    %159 = vmatpush.msra.mxu0 %v82
    %160 = vmatpush.msra.mxu0 %v78
    %161 = vmatpush.msra.mxu0 %v74
    %162 = vmatpush.msra.mxu0 %v70
    %163 = vmatpush.msra.mxu0 %v66
    %164 = vmatpush.msra.mxu0 %v62
    %165 = vmatpush.msra.mxu0 %v58
    %166 = vmatpush.msra.mxu0 %v54
    %167 = vmatpush.msra.mxu0 %v50
    %168 = vmatpush.msra.mxu0 %v46
    %169 = vmatpush.msra.mxu0 %v42
    %170 = vmatpush.msra.mxu0 %v38
    %171 = vmatpush.msra.mxu0 %v34
    %172 = vmatmul.f32.gmra.mxu0 %v30
    %v173 = vpop.f32.mrf.mxu0
    %v174 = vadd.f32 0.0, %v173
    %175 = vdwg.mxu0
    %v176 = vmax.f32 %v114, %v134
    %v177 = vmax.f32 %v154, %v174
    %v178 = vmax.f32 %v176, %v177
    %v180 = vperm.slane %v95, 0
    %v182 = vadd.f32 %v178, %v180
    %v183 = vmax.f32 %v182, 0.0
    %v184 = vld [vmem:[#allocation2 + $0x20] sm:$0xff]
    %v185 = vld [vmem:[#allocation2 + $0x28] sm:$0xff]
    %v186 = vld [vmem:[#allocation2 + $0x30] sm:$0xff]
    %v187 = vld [vmem:[#allocation2 + $0x38] sm:$0xff]
    %v188 = vld [vmem:[#allocation2 + $0x78] sm:$0xff]
    %v189 = vld [vmem:[#allocation2 + $0x80] sm:$0xff]
    %v190 = vld [vmem:[#allocation2 + $0x88] sm:$0xff]
    %v191 = vld [vmem:[#allocation2 + $0x90] sm:$0xff]
    %v192 = vld [vmem:[#allocation2 + $0xd0] sm:$0xff]
    %v193 = vld [vmem:[#allocation2 + $0xd8] sm:$0xff]
    %v194 = vld [vmem:[#allocation2 + $0xe0] sm:$0xff]
    %v195 = vld [vmem:[#allocation2 + $0xe8] sm:$0xff]
    %v196 = vld [vmem:[#allocation2 + $0x128] sm:$0xff]
    %v197 = vld [vmem:[#allocation2 + $0x130] sm:$0xff]
    %v198 = vld [vmem:[#allocation2 + $0x138] sm:$0xff]
    %v199 = vld [vmem:[#allocation2 + $0x140] sm:$0xff]
    %v200 = vld [vmem:[#allocation2 + $0x180] sm:$0xff]
    %v201 = vld [vmem:[#allocation2 + $0x188] sm:$0xff]
    %v202 = vld [vmem:[#allocation2 + $0x190] sm:$0xff]
    %v203 = vld [vmem:[#allocation2 + $0x198] sm:$0xff]
    %v204 = vld [vmem:[#allocation2 + $0x1d8] sm:$0xff]
    %v205 = vld [vmem:[#allocation2 + $0x1e0] sm:$0xff]
    %v206 = vld [vmem:[#allocation2 + $0x1e8] sm:$0xff]
    %v207 = vld [vmem:[#allocation2 + $0x1f0] sm:$0xff]
    %v208 = vld [vmem:[#allocation2 + $0x230] sm:$0xff]
    %v209 = vld [vmem:[#allocation2 + $0x238] sm:$0xff]
    %v210 = vld [vmem:[#allocation2 + $0x240] sm:$0xff]
    %v211 = vld [vmem:[#allocation2 + $0x248] sm:$0xff]
    %v212 = vld [vmem:[#allocation2 + $0x288] sm:$0xff]
    %v213 = vld [vmem:[#allocation2 + $0x290] sm:$0xff]
    %v214 = vld [vmem:[#allocation2 + $0x298] sm:$0xff]
    %v215 = vld [vmem:[#allocation2 + $0x2a0] sm:$0xff]
    %v216 = vld [vmem:[#allocation2 + $0x2e0] sm:$0xff]
    %v217 = vld [vmem:[#allocation2 + $0x2e8] sm:$0xff]
    %v218 = vld [vmem:[#allocation2 + $0x2f0] sm:$0xff]
    %v219 = vld [vmem:[#allocation2 + $0x2f8] sm:$0xff]
    %v220 = vld [vmem:[#allocation2 + $0x338] sm:$0xff]
    %v221 = vld [vmem:[#allocation2 + $0x340] sm:$0xff]
    %v222 = vld [vmem:[#allocation2 + $0x348] sm:$0xff]
    %v223 = vld [vmem:[#allocation2 + $0x350] sm:$0xff]
    %v224 = vld [vmem:[#allocation2 + $0x390] sm:$0xff]
    %v225 = vld [vmem:[#allocation2 + $0x398] sm:$0xff]
    %v226 = vld [vmem:[#allocation2 + $0x3a0] sm:$0xff]
    %v227 = vld [vmem:[#allocation2 + $0x3a8] sm:$0xff]
    %v228 = vld [vmem:[#allocation2 + $0x3e8] sm:$0xff]
    %v229 = vld [vmem:[#allocation2 + $0x3f0] sm:$0xff]
    %v230 = vld [vmem:[#allocation2 + $0x3f8] sm:$0xff]
    %v231 = vld [vmem:[#allocation2 + $0x400] sm:$0xff]
    %v232 = vld [vmem:[#allocation2 + $0x440] sm:$0xff]
    %v233 = vld [vmem:[#allocation2 + $0x448] sm:$0xff]
    %v234 = vld [vmem:[#allocation2 + $0x450] sm:$0xff]
    %v235 = vld [vmem:[#allocation2 + $0x458] sm:$0xff]
    %v236 = vld [vmem:[#allocation2 + $0x498] sm:$0xff]
    %v237 = vld [vmem:[#allocation2 + $0x4a0] sm:$0xff]
    %v238 = vld [vmem:[#allocation2 + $0x4a8] sm:$0xff]
    %v239 = vld [vmem:[#allocation2 + $0x4b0] sm:$0xff]
    %v240 = vld [vmem:[#allocation2 + $0x4f0] sm:$0xff]
    %v241 = vld [vmem:[#allocation2 + $0x4f8] sm:$0xff]
    %v242 = vld [vmem:[#allocation2 + $0x500] sm:$0xff]
    %v243 = vld [vmem:[#allocation2 + $0x508] sm:$0xff]
    %v244 = vld [vmem:[#allocation2 + $0x548] sm:$0xff]
    %v245 = vld [vmem:[#allocation2 + $0x550] sm:$0xff]
    %v246 = vld [vmem:[#allocation2 + $0x558] sm:$0xff]
    %v247 = vld [vmem:[#allocation2 + $0x560] sm:$0xff]
    %v248 = vld [vmem:[%s2 + $0x1] sm:$0x1]
    %249 = vmatpush.msra.mxu0 %v244
    %250 = vmatpush.msra.mxu0 %v240
    %251 = vmatpush.msra.mxu0 %v236
    %252 = vmatpush.msra.mxu0 %v232
    %253 = vmatpush.msra.mxu0 %v228
    %254 = vmatpush.msra.mxu0 %v224
    %255 = vmatpush.msra.mxu0 %v220
    %256 = vmatpush.msra.mxu0 %v216
    %257 = vmatpush.msra.mxu0 %v212
    %258 = vmatpush.msra.mxu0 %v208
    %259 = vmatpush.msra.mxu0 %v204
    %260 = vmatpush.msra.mxu0 %v200
    %261 = vmatpush.msra.mxu0 %v196
    %262 = vmatpush.msra.mxu0 %v192
    %263 = vmatpush.msra.mxu0 %v188
    %264 = vmatpush.msra.mxu0 %v184
    %265 = vmatmul.f32.gmra.mxu0 %v183
    %v266 = vpop.f32.mrf.mxu0
    %v267 = vadd.f32 0.0, %v266
    %268 = vdwg.mxu0
    %269 = vmatpush.msra.mxu0 %v245
    %270 = vmatpush.msra.mxu0 %v241
    %271 = vmatpush.msra.mxu0 %v237
    %272 = vmatpush.msra.mxu0 %v233
    %273 = vmatpush.msra.mxu0 %v229
    %274 = vmatpush.msra.mxu0 %v225
    %275 = vmatpush.msra.mxu0 %v221
    %276 = vmatpush.msra.mxu0 %v217
    %277 = vmatpush.msra.mxu0 %v213
    %278 = vmatpush.msra.mxu0 %v209
    %279 = vmatpush.msra.mxu0 %v205
    %280 = vmatpush.msra.mxu0 %v201
    %281 = vmatpush.msra.mxu0 %v197
    %282 = vmatpush.msra.mxu0 %v193
    %283 = vmatpush.msra.mxu0 %v189
    %284 = vmatpush.msra.mxu0 %v185
    %285 = vmatmul.f32.gmra.mxu0 %v183
    %v286 = vpop.f32.mrf.mxu0
    %v287 = vadd.f32 0.0, %v286
    %288 = vdwg.mxu0
    %289 = vmatpush.msra.mxu0 %v246
    %290 = vmatpush.msra.mxu0 %v242
    %291 = vmatpush.msra.mxu0 %v238
    %292 = vmatpush.msra.mxu0 %v234
    %293 = vmatpush.msra.mxu0 %v230
    %294 = vmatpush.msra.mxu0 %v226
    %295 = vmatpush.msra.mxu0 %v222
    %296 = vmatpush.msra.mxu0 %v218
    %297 = vmatpush.msra.mxu0 %v214
    %298 = vmatpush.msra.mxu0 %v210
    %299 = vmatpush.msra.mxu0 %v206
    %300 = vmatpush.msra.mxu0 %v202
    %301 = vmatpush.msra.mxu0 %v198
    %302 = vmatpush.msra.mxu0 %v194
    %303 = vmatpush.msra.mxu0 %v190
    %304 = vmatpush.msra.mxu0 %v186
    %305 = vmatmul.f32.gmra.mxu0 %v183
    %v306 = vpop.f32.mrf.mxu0
    %v307 = vadd.f32 0.0, %v306
    %308 = vdwg.mxu0
    %309 = vmatpush.msra.mxu0 %v247
    %310 = vmatpush.msra.mxu0 %v243
    %311 = vmatpush.msra.mxu0 %v239
    %312 = vmatpush.msra.mxu0 %v235
    %313 = vmatpush.msra.mxu0 %v231
    %314 = vmatpush.msra.mxu0 %v227
    %315 = vmatpush.msra.mxu0 %v223
    %316 = vmatpush.msra.mxu0 %v219
    %317 = vmatpush.msra.mxu0 %v215
    %318 = vmatpush.msra.mxu0 %v211
    %319 = vmatpush.msra.mxu0 %v207
    %320 = vmatpush.msra.mxu0 %v203
    %321 = vmatpush.msra.mxu0 %v199
    %322 = vmatpush.msra.mxu0 %v195
    %323 = vmatpush.msra.mxu0 %v191
    %324 = vmatpush.msra.mxu0 %v187
    %325 = vmatmul.f32.gmra.mxu0 %v183
    %v326 = vpop.f32.mrf.mxu0
    %v327 = vadd.f32 0.0, %v326
    %328 = vdwg.mxu0
    %v329 = vmax.f32 %v267, %v287
    %v330 = vmax.f32 %v307, %v327
    %v331 = vmax.f32 %v329, %v330
    %v333 = vperm.slane %v248, 0
    %v335 = vadd.f32 %v331, %v333
    %v336 = vmax.f32 %v335, 0.0
    %v337 = vld [vmem:[#allocation2 + $0x40] sm:$0xff]
    %v338 = vld [vmem:[#allocation2 + $0x98] sm:$0xff]
    %v339 = vld [vmem:[#allocation2 + $0xf0] sm:$0xff]
    %v340 = vld [vmem:[#allocation2 + $0x148] sm:$0xff]
    %v341 = vld [vmem:[#allocation2 + $0x1a0] sm:$0xff]
    %v342 = vld [vmem:[#allocation2 + $0x1f8] sm:$0xff]
    %v343 = vld [vmem:[#allocation2 + $0x250] sm:$0xff]
    %v344 = vld [vmem:[#allocation2 + $0x2a8] sm:$0xff]
    %v345 = vld [vmem:[#allocation2 + $0x300] sm:$0xff]
    %v346 = vld [vmem:[#allocation2 + $0x358] sm:$0xff]
    %v347 = vld [vmem:[#allocation2 + $0x3b0] sm:$0xff]
    %v348 = vld [vmem:[#allocation2 + $0x408] sm:$0xff]
    %v349 = vld [vmem:[#allocation2 + $0x460] sm:$0xff]
    %v350 = vld [vmem:[#allocation2 + $0x4b8] sm:$0xff]
    %v351 = vld [vmem:[#allocation2 + $0x510] sm:$0xff]
    %v352 = vld [vmem:[#allocation2 + $0x568] sm:$0xff]
    %v353 = vld [vmem:[%s2 + $0x2] sm:$0x1]
    %v355 = vperm.slane %v353, 0
    %357 = vmatpush.msra.mxu0 %v352
    %358 = vmatpush.msra.mxu0 %v351
    %359 = vmatpush.msra.mxu0 %v350
    %360 = vmatpush.msra.mxu0 %v349
    %361 = vmatpush.msra.mxu0 %v348
    %362 = vmatpush.msra.mxu0 %v347
    %363 = vmatpush.msra.mxu0 %v346
    %364 = vmatpush.msra.mxu0 %v345
    %365 = vmatpush.msra.mxu0 %v344
    %366 = vmatpush.msra.mxu0 %v343
    %367 = vmatpush.msra.mxu0 %v342
    %368 = vmatpush.msra.mxu0 %v341
    %369 = vmatpush.msra.mxu0 %v340
    %370 = vmatpush.msra.mxu0 %v339
    %371 = vmatpush.msra.mxu0 %v338
    %372 = vmatpush.msra.mxu0 %v337
    %373 = vmatmul.f32.gmra.mxu0 %v336
    %v374 = vpop.f32.mrf.mxu0
    %v375 = vadd.f32 %v355, %v374
    %376 = vdwg.mxu0
    %v377 = vmax.f32 %v375, 0.0
    %v378 = vld [vmem:[#allocation2 + $0x48] sm:$0xff]
    %v379 = vld [vmem:[#allocation2 + $0xa0] sm:$0xff]
    %v380 = vld [vmem:[#allocation2 + $0xf8] sm:$0xff]
    %v381 = vld [vmem:[#allocation2 + $0x150] sm:$0xff]
    %v382 = vld [vmem:[#allocation2 + $0x1a8] sm:$0xff]
    %v383 = vld [vmem:[#allocation2 + $0x200] sm:$0xff]
    %v384 = vld [vmem:[#allocation2 + $0x258] sm:$0xff]
    %v385 = vld [vmem:[#allocation2 + $0x2b0] sm:$0xff]
    %v386 = vld [vmem:[#allocation2 + $0x308] sm:$0xff]
    %v387 = vld [vmem:[#allocation2 + $0x360] sm:$0xff]
    %v388 = vld [vmem:[#allocation2 + $0x3b8] sm:$0xff]
    %v389 = vld [vmem:[#allocation2 + $0x410] sm:$0xff]
    %v390 = vld [vmem:[#allocation2 + $0x468] sm:$0xff]
    %v391 = vld [vmem:[#allocation2 + $0x4c0] sm:$0xff]
    %v392 = vld [vmem:[#allocation2 + $0x518] sm:$0xff]
    %v393 = vld [vmem:[#allocation2 + $0x570] sm:$0xff]
    %v394 = vld [vmem:[%s2 + $0x3] sm:$0x1]
    %v396 = vperm.slane %v394, 0
    %398 = vmatpush.msra.mxu0 %v393
    %399 = vmatpush.msra.mxu0 %v392
    %400 = vmatpush.msra.mxu0 %v391
    %401 = vmatpush.msra.mxu0 %v390
    %402 = vmatpush.msra.mxu0 %v389
    %403 = vmatpush.msra.mxu0 %v388
    %404 = vmatpush.msra.mxu0 %v387
    %405 = vmatpush.msra.mxu0 %v386
    %406 = vmatpush.msra.mxu0 %v385
    %407 = vmatpush.msra.mxu0 %v384
    %408 = vmatpush.msra.mxu0 %v383
    %409 = vmatpush.msra.mxu0 %v382
    %410 = vmatpush.msra.mxu0 %v381
    %411 = vmatpush.msra.mxu0 %v380
    %412 = vmatpush.msra.mxu0 %v379
    %413 = vmatpush.msra.mxu0 %v378
    %414 = vmatmul.f32.gmra.mxu0 %v377
    %v415 = vpop.f32.mrf.mxu0
    %v416 = vadd.f32 %v396, %v415
    %417 = vdwg.mxu0
    %v418 = vmax.f32 %v416, 0.0
    %v419 = vld [vmem:[#allocation2 + $0x50] sm:$0xff]
    %v420 = vld [vmem:[#allocation2 + $0xa8] sm:$0xff]
    %v421 = vld [vmem:[#allocation2 + $0x100] sm:$0xff]
    %v422 = vld [vmem:[#allocation2 + $0x158] sm:$0xff]
    %v423 = vld [vmem:[#allocation2 + $0x1b0] sm:$0xff]
    %v424 = vld [vmem:[#allocation2 + $0x208] sm:$0xff]
    %v425 = vld [vmem:[#allocation2 + $0x260] sm:$0xff]
    %v426 = vld [vmem:[#allocation2 + $0x2b8] sm:$0xff]
    %v427 = vld [vmem:[#allocation2 + $0x310] sm:$0xff]
    %v428 = vld [vmem:[#allocation2 + $0x368] sm:$0xff]
    %v429 = vld [vmem:[#allocation2 + $0x3c0] sm:$0xff]
    %v430 = vld [vmem:[#allocation2 + $0x418] sm:$0xff]
    %v431 = vld [vmem:[#allocation2 + $0x470] sm:$0xff]
    %v432 = vld [vmem:[#allocation2 + $0x4c8] sm:$0xff]
    %v433 = vld [vmem:[#allocation2 + $0x520] sm:$0xff]
    %v434 = vld [vmem:[#allocation2 + $0x578] sm:$0xff]
    %v435 = vld [vmem:[%s2 + $0x4] sm:$0x1]
    %v437 = vperm.slane %v435, 0
    %439 = vmatpush.msra.mxu0 %v434
    %440 = vmatpush.msra.mxu0 %v433
    %441 = vmatpush.msra.mxu0 %v432
    %442 = vmatpush.msra.mxu0 %v431
    %443 = vmatpush.msra.mxu0 %v430
    %444 = vmatpush.msra.mxu0 %v429
    %445 = vmatpush.msra.mxu0 %v428
    %446 = vmatpush.msra.mxu0 %v427
    %447 = vmatpush.msra.mxu0 %v426
    %448 = vmatpush.msra.mxu0 %v425
    %449 = vmatpush.msra.mxu0 %v424
    %450 = vmatpush.msra.mxu0 %v423
    %451 = vmatpush.msra.mxu0 %v422
    %452 = vmatpush.msra.mxu0 %v421
    %453 = vmatpush.msra.mxu0 %v420
    %454 = vmatpush.msra.mxu0 %v419
    %455 = vmatmul.f32.gmra.mxu0 %v418
    %v456 = vpop.f32.mrf.mxu0
    %v457 = vadd.f32 %v437, %v456
    %458 = vdwg.mxu0
    %459 = vst [vmem:[%s3] sm:$0x3] %v457
    // Predicated region
    $region18: #{cnn_forward.1} parent=1 // pred_check
      _
    $region19: #{cnn_forward.1} parent=1 // pred_check_branch
      %461 = sbr.rel (0) target = $region21
    $region20: #{cnn_forward.1} parent=1 // pred_region
      _
    $region21: #{cnn_forward.1} parent=1 // pred_fallthru
      _
    // Predicated region
    $region22: #{cnn_forward.1} parent=1 // pred_check
      _
    $region23: #{cnn_forward.1} parent=1 // pred_check_branch
      %463 = sbr.rel (0) target = $region25
    $region24: #{cnn_forward.1} parent=1 // pred_region
      _
    $region25: #{cnn_forward.1} parent=1 // pred_fallthru
      _
    %464 = vsyncpa [#allocation3], 1

</llo_original>
